<compile_context>
chip_gen: v6e
topology: v6e:2x2x1
jax: 0.10.0
libtpu: 0.0.40
codegen_flags: <defaults>
</compile_context>

<pallas_src>
import jax
import jax.numpy as jnp
from jax.experimental import pallas as pl
from jax.experimental.pallas import tpu as pltpu


def _joint_logsoftmax_kernel(e_ref, d_ref, out_ref):
    """Broadcast-add projected enc/dec tiles and log_softmax over the vocab axis.

    e_ref  : (1, tT, V) f32  encoder projection tile   (enc @ W_enc^T)
    d_ref  : (1, tU, V) f32  decoder projection tile   (dec @ W_dec^T + bias)
    out_ref: (1, tT, tU, V)  log-probability tile
    """
    e = e_ref[0]                                    # (tT, V)
    d = d_ref[0]                                    # (tU, V)

    # Pure VPU broadcast-add; bias already folded into d.
    logits = e[:, None, :] + d[None, :, :]          # (tT, tU, V) f32

    # Numerically-stable log_softmax over the vocab (lane) axis.
    m = jnp.max(logits, axis=-1, keepdims=True)
    shifted = logits - m
    lse = jnp.log(jnp.sum(jnp.exp(shifted), axis=-1, keepdims=True))
    out_ref[0] = (shifted - lse).astype(out_ref.dtype)


def _largest_divisor_leq(n, cap):
    cap = max(1, min(int(n), int(cap)))
    for d in range(cap, 0, -1):
        if n % d == 0:
            return d
    return 1


def _select_tiles(T, U, V, out_bytes, vmem_budget_bytes):
    """Pick (tT, tU) that divide (T, U) and keep the per-step VMEM cost bounded."""
    def cost(tT, tU):
        # Double-buffered output + inputs, plus a rough allowance for the f32
        # (tT, tU, V) logits temporaries the compiler keeps live.
        return (2 * tT * tU * V * out_bytes
                + 2 * tT * V * 4
                + 2 * tU * V * 4
                + 2 * tT * tU * V * 4)

    tT = _largest_divisor_leq(T, 64)
    tU = _largest_divisor_leq(U, 16)
    while tT > 1 and cost(tT, tU) > vmem_budget_bytes:
        tT = _largest_divisor_leq(T, tT - 1)
    while tU > 1 and cost(tT, tU) > vmem_budget_bytes:
        tU = _largest_divisor_leq(U, tU - 1)
    return tT, tU


def joint_net(encoder_output, decoder_output, fc_weight, fc_bias,
              out_dtype=jnp.float32):
    """Pallas implementation of JointNet.forward for 3-D inputs.

    encoder_output: (B, T, D_enc) float32
    decoder_output: (B, U, D_dec) float32
    fc_weight     : (V, D_enc + D_dec) float32   (torch nn.Linear layout)
    fc_bias       : (V,) float32
    returns       : (B, T, U, V) `out_dtype` log-probabilities
    """
    B, T, d_enc = encoder_output.shape
    B2, U, d_dec = decoder_output.shape
    assert B == B2
    V = fc_weight.shape[0]
    assert fc_weight.shape[1] == d_enc + d_dec

    # ---- Hoisted projections (computed once, tiny vs. T*U*V elementwise) ----
    # concat(enc, dec) @ W^T == enc @ W_enc^T + dec @ W_dec^T  (split by column)
    w_enc = fc_weight[:, :d_enc].T.astype(jnp.float32)          # (D_enc, V)
    w_dec = fc_weight[:, d_enc:].T.astype(jnp.float32)          # (D_dec, V)
    e_proj = jnp.einsum("btd,dv->btv",
                        encoder_output.astype(jnp.float32), w_enc,
                        preferred_element_type=jnp.float32)     # (B, T, V)
    # Fold the bias into the decoder projection once.
    d_proj = jnp.einsum("bud,dv->buv",
                        decoder_output.astype(jnp.float32), w_dec,
                        preferred_element_type=jnp.float32)
    d_proj = d_proj + fc_bias.astype(jnp.float32)[None, None, :]  # (B, U, V)

    # ---- Generation-aware tiling / VMEM limits ------------------------------
    try:
        vmem_cap = int(pltpu.get_tpu_info().vmem_capacity_bytes)
    except Exception:
        vmem_cap = 64 * 1024 * 1024     # assume the smallest VMEM (v7x) if unknown
    out_bytes = jnp.dtype(out_dtype).itemsize
    budget = min(vmem_cap // 3, 24 * 1024 * 1024)
    tT, tU = _select_tiles(T, U, V, out_bytes, budget)
    vmem_limit = int(min(vmem_cap * 3 // 4, 96 * 1024 * 1024))

    grid = (B, T // tT, U // tU)
    grid_spec = pltpu.PrefetchScalarGridSpec(
        num_scalar_prefetch=0,
        grid=grid,
        in_specs=[
            pl.BlockSpec((1, tT, V), lambda b, ti, ui: (b, ti, 0)),
            pl.BlockSpec((1, tU, V), lambda b, ti, ui: (b, ui, 0)),
        ],
        out_specs=pl.BlockSpec((1, tT, tU, V),
                               lambda b, ti, ui: (b, ti, ui, 0)),
    )

    return pl.pallas_call(
        _joint_logsoftmax_kernel,
        out_shape=jax.ShapeDtypeStruct((B, T, U, V), out_dtype),
        grid_spec=grid_spec,
        compiler_params=pltpu.CompilerParams(
            dimension_semantics=("parallel", "parallel", "parallel"),
            vmem_limit_bytes=vmem_limit),
    )(e_proj, d_proj)


def joint_net_reference(encoder_output, decoder_output, fc_weight, fc_bias):
    """Pure-JAX reference matching JointNet.forward (dim == 3 path)."""
    B, T, _ = encoder_output.shape
    _, U, _ = decoder_output.shape
    enc = jnp.broadcast_to(encoder_output[:, :, None, :],
                           (B, T, U, encoder_output.shape[-1]))
    dec = jnp.broadcast_to(decoder_output[:, None, :, :],
                           (B, T, U, decoder_output.shape[-1]))
    cat = jnp.concatenate([enc, dec], axis=-1)
    logits = cat @ fc_weight.T + fc_bias
    return jax.nn.log_softmax(logits, axis=-1)


if __name__ == "__main__":
    # Small, ContextNet-consistent shapes:
    #   batch=2, encoder seq T=8, decoder seq U=8,
    #   encoder_output_dim=32, decoder_output_dim=32, num_vocabs=128.
    B, T, U = 2, 8, 8
    D_ENC, D_DEC, V = 32, 32, 128

    key = jax.random.PRNGKey(0)
    k_enc, k_dec, k_w, k_b = jax.random.split(key, 4)

    # Synthetic (deterministic) encoder / decoder outputs.
    encoder_output = jax.random.normal(k_enc, (B, T, D_ENC), dtype=jnp.float32)
    decoder_output = jax.random.normal(k_dec, (B, U, D_DEC), dtype=jnp.float32)

    # Deterministic nn.Linear(D_ENC + D_DEC -> V) parameters (torch init range).
    bound = 1.0 / jnp.sqrt(jnp.float32(D_ENC + D_DEC))
    fc_weight = jax.random.uniform(k_w, (V, D_ENC + D_DEC),
                                   minval=-bound, maxval=bound,
                                   dtype=jnp.float32)
    fc_bias = jax.random.uniform(k_b, (V,), minval=-bound, maxval=bound,
                                 dtype=jnp.float32)

    ref = joint_net_reference(encoder_output, decoder_output, fc_weight, fc_bias)

    # f32 output path (exact-semantics check).
    out_f32 = joint_net(encoder_output, decoder_output, fc_weight, fc_bias,
                        out_dtype=jnp.float32)
    out_f32 = jax.block_until_ready(out_f32)
    assert out_f32.shape == (B, T, U, V)
    assert jnp.allclose(out_f32, ref, atol=1e-4, rtol=1e-4), "f32 mismatch vs reference"

    # bf16 output path (production-recommended: halves the HBM writeback).
    out_bf16 = joint_net(encoder_output, decoder_output, fc_weight, fc_bias,
                         out_dtype=jnp.bfloat16)
    out_bf16 = jax.block_until_ready(out_bf16)
    assert out_bf16.shape == (B, T, U, V)
    assert out_bf16.dtype == jnp.bfloat16
    assert jnp.allclose(out_bf16.astype(jnp.float32), ref, atol=1e-1, rtol=5e-2), \
        "bf16 mismatch vs reference"

    print("KERNEL_OK")
</pallas_src>

<mosaic_0001>
module attributes {stable_mosaic.version = 11 : i64} {
  func.func @_joint_logsoftmax_kernel(%arg0: i32, %arg1: i32, %arg2: i32, %arg3: memref<1x8x128xf32, #tpu.memory_space<vmem>>, %arg4: memref<1x8x128xf32, #tpu.memory_space<vmem>>, %arg5: memref<1x8x8x128xf32, #tpu.memory_space<vmem>>) attributes {dimension_semantics = [#tpu.dimension_semantics<parallel>, #tpu.dimension_semantics<parallel>, #tpu.dimension_semantics<parallel>], iteration_bounds = array<i64: 2, 1, 1>, scalar_prefetch = 0 : i64, scratch_operands = 0 : i64, tpu.core_type = #tpu.core_type<tc>, window_params = [{transform_indices = @transform_0, window_bounds = array<i64: 1, 8, 128>}, {transform_indices = @transform_1, window_bounds = array<i64: 1, 8, 128>}, {transform_indices = @transform_2, window_bounds = array<i64: 1, 8, 8, 128>}]} {
    %c0 = arith.constant 0 : index
    %c0_0 = arith.constant 0 : index
    %c0_1 = arith.constant 0 : index
    %0 = vector.load %arg3[%c0, %c0_0, %c0_1] : memref<1x8x128xf32, #tpu.memory_space<vmem>>, vector<1x8x128xf32>
    %1 = vector.shape_cast %0 : vector<1x8x128xf32> to vector<8x128xf32>
    %c0_2 = arith.constant 0 : index
    %c0_3 = arith.constant 0 : index
    %c0_4 = arith.constant 0 : index
    %2 = vector.load %arg4[%c0_2, %c0_3, %c0_4] : memref<1x8x128xf32, #tpu.memory_space<vmem>>, vector<1x8x128xf32>
    %3 = vector.shape_cast %2 : vector<1x8x128xf32> to vector<8x128xf32>
    %4 = vector.shape_cast %1 : vector<8x128xf32> to vector<8x1x128xf32>
    %5 = vector.shape_cast %3 : vector<8x128xf32> to vector<1x8x128xf32>
    %6 = vector.broadcast %4 : vector<8x1x128xf32> to vector<8x8x128xf32>
    %7 = vector.broadcast %5 : vector<1x8x128xf32> to vector<8x8x128xf32>
    %8 = arith.addf %6, %7 : vector<8x8x128xf32>
    %cst = arith.constant dense<0xFF800000> : vector<8x8xf32>
    %9 = vector.multi_reduction <maximumf>, %8, %cst [2] : vector<8x8x128xf32> to vector<8x8xf32>
    %10 = vector.shape_cast %9 : vector<8x8xf32> to vector<8x8x1xf32>
    %11 = vector.broadcast %10 : vector<8x8x1xf32> to vector<8x8x128xf32>
    %12 = arith.subf %8, %11 : vector<8x8x128xf32>
    %13 = math.exp %12 : vector<8x8x128xf32>
    %cst_5 = arith.constant dense<0.000000e+00> : vector<8x8xf32>
    %14 = vector.multi_reduction <add>, %13, %cst_5 [2] : vector<8x8x128xf32> to vector<8x8xf32>
    %15 = vector.shape_cast %14 : vector<8x8xf32> to vector<8x8x1xf32>
    %16 = math.log %15 : vector<8x8x1xf32>
    %17 = vector.broadcast %16 : vector<8x8x1xf32> to vector<8x8x128xf32>
    %18 = arith.subf %12, %17 : vector<8x8x128xf32>
    %c0_6 = arith.constant 0 : index
    %c0_7 = arith.constant 0 : index
    %c0_8 = arith.constant 0 : index
    %c0_9 = arith.constant 0 : index
    %19 = vector.load %arg5[%c0_6, %c0_7, %c0_8, %c0_9] : memref<1x8x8x128xf32, #tpu.memory_space<vmem>>, vector<1x8x8x128xf32>
    %20 = vector.shape_cast %19 : vector<1x8x8x128xf32> to vector<8x8x128xf32>
    %21 = vector.shape_cast %18 : vector<8x8x128xf32> to vector<1x8x8x128xf32>
    tpu.vector_store %arg5[%c0_6, %c0_7, %c0_8, %c0_9], %21 {strides = array<i32>} : memref<1x8x8x128xf32, #tpu.memory_space<vmem>>, vector<1x8x8x128xf32>,
    return
  }
  func.func @transform_0(%arg0: i32, %arg1: i32, %arg2: i32) -> (i32, i32, i32) {
    %c0_i32 = arith.constant 0 : i32
    %c0_i32_0 = arith.constant 0 : i32
    return %arg0, %arg1, %c0_i32 : i32, i32, i32
  }
  func.func @transform_1(%arg0: i32, %arg1: i32, %arg2: i32) -> (i32, i32, i32) {
    %c0_i32 = arith.constant 0 : i32
    %c0_i32_0 = arith.constant 0 : i32
    return %arg0, %arg2, %c0_i32 : i32, i32, i32
  }
  func.func @transform_2(%arg0: i32, %arg1: i32, %arg2: i32) -> (i32, i32, i32, i32) {
    %c0_i32 = arith.constant 0 : i32
    %c0_i32_0 = arith.constant 0 : i32
    return %arg0, %arg1, %arg2, %c0_i32 : i32, i32, i32, i32
  }
}

</mosaic_0001>

<llo_original>
// kernel: tpu_custom_call.1
$region0: #{tpu_custom_call.1}
  #allocation0 [shape = 'u32[]', space=smem, size = 0x4, offset = 0x4, fixed_abs, tag = 'smem constant byte address 0x4 - core index']
  #allocation1 [shape = 'u32[144,128]{1,0:T(1,128)}', space=vmem, size = 0x12000, scoped, tag = 'internal scratch']
  %s0 = inlined_call_operand.hbm [shape: f32[2,8,128], index: 0, kind: input, shape index: {}]
  %s1 = inlined_call_operand.hbm [shape: f32[2,8,128], index: 1, kind: input, shape index: {}]
  %s2 = inlined_call_operand.hbm [shape: f32[2,8,8,128], index: 2, kind: output, shape index: {}]
  %s3 = sld [smem:[#allocation0]]
  $region49: #{tpu_custom_call.1} parent=0
    _
  %s5 = ssub.s32 1, %s3
  %s6 = scalar_select 0, %s5, %s3
  $region1: #{tpu_custom_call.1} parent=0
    #allocation2 [shape = 'u8[8192]{0}', space=vmem, size = 0x2000, scoped, tag = 'input window, operand 0']
    #allocation3 [shape = 's32[2]{0}', space=sflag, size = 0x8, scoped, tag = 'scoped memory for tpu_custom_call.1']
    #allocation4 [shape = 's32[2]{0}', space=sflag, size = 0x8, scoped, tag = 'scoped memory for tpu_custom_call.1']
    #allocation5 [shape = 'u8[8192]{0}', space=vmem, size = 0x2000, scoped, tag = 'input window, operand 1']
    #allocation6 [shape = 's32[2]{0}', space=sflag, size = 0x8, scoped, tag = 'scoped memory for tpu_custom_call.1']
    #allocation7 [shape = 'u8[65536]{0}', space=vmem, size = 0x10000, scoped, tag = 'output window, operand 0']
    %7 = vsyncpa [#allocation3], 0
    %s8 = scalar_lea.sflag [#allocation3], 1
    %9 = vsyncpa %s8, 0
    %10 = vsyncpa [#allocation6], 0
    %s11 = scalar_lea.sflag [#allocation6], 1
    %12 = vsyncpa %s11, 0
    %13 = vsyncpa [#allocation4], 0
    %s14 = scalar_lea.sflag [#allocation4], 1
    %15 = vsyncpa %s14, 0
    loop: start=0, step=1, limit=4
    $region2: #{tpu_custom_call.1} parent=1 // loop_pre_header
      _
    $region3: #{tpu_custom_call.1} parent=1 // loop_header
      %s17 = sphi 0, %s21
      %p18 = scmp.ge.s32.totalorder %s17, 4
      %s24 = sphi 0, %s43
      %s25 = sphi 0, %s39
      %s26 = sphi 0, %s35
      %s27 = sphi 0, %s24
      %s28 = sphi 0, %s25
      %s29 = sphi 0, %s26
      %s30 = sphi 0, %s27
      %s31 = sphi 0, %s28
      %s32 = sphi 0, %s29
      %s48 = sphi 0, %s50
      %s51 = sphi 0, %s48
      %s52 = sphi 0, %s51
      %s68 = sphi 0, %s52
      %s76 = sphi 0, %s78
      %s79 = sphi 0, %s76
      %s80 = sphi 0, %s79
      %s96 = sphi 0, %s80
      %s106 = sphi 0, %s108
      %s109 = sphi 0, %s106
      %s110 = sphi 0, %s109
      %s126 = sphi 0, %s110
    $region4: #{tpu_custom_call.1} parent=1 // loop_header_branch
      %20 = sbr.rel (%p18) target = $region8
    $region5: #{tpu_custom_call.1} parent=1 // loop_body
      %s22 = ssub.s32 %s17, 1
      %s23 = ssub.s32 %s17, 2
      %s33 = sadd.s32 1, %s26
      %p34 = scmp.ge.s32.totalorder %s33, 1
      %s35 = scalar_select %p34, 0, %s33
      %s36 = sadd.s32 1, %s25
      %s37 = scalar_select %p34, %s36, %s25
      %p38 = scmp.ge.s32.totalorder %s37, 1
      %s39 = scalar_select %p38, 0, %s37
      %s40 = sadd.s32 1, %s24
      %s41 = scalar_select %p38, %s40, %s24
      %p42 = scmp.ge.s32.totalorder %s41, 2
      %s43 = scalar_select %p42, 0, %s41
      %s44 = ssub.s32 %s24, %s43
      %s45 = ssub.s32 %s25, %s39
      %s46 = sor.u32 %s44, %s45
      %p47 = scmp.eq.s32.totalorder %s46, 0
      %s49 = sadd.s32 %s48, 1
      %s50 = scalar_select %p47, %s48, %s49
      %p53 = pneg %p47
      %p54 = scmp.eq.s32.totalorder %s17, 1
      %p55 = por %p53, %p54
      %p56 = scmp.ne.s32.totalorder %s48, %s51
      %p57 = scmp.eq.s32.totalorder %s17, 0
      %p58 = por %p56, %p57
      %p59 = scmp.ne.s32.totalorder %s48, %s51
      %p60 = scmp.eq.s32.totalorder %s22, 1
      %p61 = por %p59, %p60
      %p62 = scmp.ne.s32.totalorder %s51, %s52
      %p63 = scmp.eq.s32.totalorder %s22, 0
      %p64 = por %p62, %p63
      %p65 = scmp.ne.s32.totalorder %s51, %s52
      %p66 = scmp.eq.s32.totalorder %s23, 1
      %p67 = por %p65, %p66
      %p69 = scmp.ne.s32.totalorder %s52, %s68
      %p70 = scmp.eq.s32.totalorder %s23, 0
      %p71 = por %p69, %p70
      %s72 = ssub.s32 %s24, %s43
      %s73 = ssub.s32 %s26, %s35
      %s74 = sor.u32 %s72, %s73
      %p75 = scmp.eq.s32.totalorder %s74, 0
      %s77 = sadd.s32 %s76, 1
      %s78 = scalar_select %p75, %s76, %s77
      %p81 = pneg %p75
      %p82 = scmp.eq.s32.totalorder %s17, 1
      %p83 = por %p81, %p82
      %p84 = scmp.ne.s32.totalorder %s76, %s79
      %p85 = scmp.eq.s32.totalorder %s17, 0
      %p86 = por %p84, %p85
      %p87 = scmp.ne.s32.totalorder %s76, %s79
      %p88 = scmp.eq.s32.totalorder %s22, 1
      %p89 = por %p87, %p88
      %p90 = scmp.ne.s32.totalorder %s79, %s80
      %p91 = scmp.eq.s32.totalorder %s22, 0
      %p92 = por %p90, %p91
      %p93 = scmp.ne.s32.totalorder %s79, %s80
      %p94 = scmp.eq.s32.totalorder %s23, 1
      %p95 = por %p93, %p94
      %p97 = scmp.ne.s32.totalorder %s80, %s96
      %p98 = scmp.eq.s32.totalorder %s23, 0
      %p99 = por %p97, %p98
      %s100 = ssub.s32 %s24, %s43
      %s101 = ssub.s32 %s25, %s39
      %s102 = sor.u32 %s100, %s101
      %s103 = ssub.s32 %s26, %s35
      %s104 = sor.u32 %s102, %s103
      %p105 = scmp.eq.s32.totalorder %s104, 0
      %s107 = sadd.s32 %s106, 1
      %s108 = scalar_select %p105, %s106, %s107
      %p111 = pneg %p105
      %p112 = scmp.eq.s32.totalorder %s17, 1
      %p113 = por %p111, %p112
      %p114 = scmp.ne.s32.totalorder %s106, %s109
      %p115 = scmp.eq.s32.totalorder %s17, 0
      %p116 = por %p114, %p115
      %p117 = scmp.ne.s32.totalorder %s106, %s109
      %p118 = scmp.eq.s32.totalorder %s22, 1
      %p119 = por %p117, %p118
      %p120 = scmp.ne.s32.totalorder %s109, %s110
      %p121 = scmp.eq.s32.totalorder %s22, 0
      %p122 = por %p120, %p121
      %p123 = scmp.ne.s32.totalorder %s109, %s110
      %p124 = scmp.eq.s32.totalorder %s23, 1
      %p125 = por %p123, %p124
      %p127 = scmp.ne.s32.totalorder %s110, %s126
      %p128 = scmp.eq.s32.totalorder %s23, 0
      %p129 = por %p127, %p128
      %p130 = scmp.le.s32.totalorder 1, %s17
      %p131 = scmp.lt.s32.totalorder %s17, 3
      %p132 = pnand %p130, %p131
      %p133 = pneg %p132
      // Predicated region
      $region9: #{tpu_custom_call.1} parent=5 // pred_check
        _
      $region10: #{tpu_custom_call.1} parent=5 // pred_check_branch
        %135 = sbr.rel (%p132) target = $region12
      $region11: #{tpu_custom_call.1} parent=5 // pred_region
        %s136 = ssub.s32 %s17, 1
      $region12: #{tpu_custom_call.1} parent=5 // pred_fallthru
        _
      %p137 = scmp.lt.s32.totalorder %s17, 2
      // Predicated region
      $region13: #{tpu_custom_call.1} parent=5 // pred_check
        %p138 = pneg %p137
      $region14: #{tpu_custom_call.1} parent=5 // pred_check_branch
        %140 = sbr.rel (%p138) target = $region16
      $region15: #{tpu_custom_call.1} parent=5 // pred_region
        // Predicated region
        $region17: #{tpu_custom_call.1} parent=15 // pred_check
          %p141 = pneg %p58
        $region18: #{tpu_custom_call.1} parent=15 // pred_check_branch
          %143 = sbr.rel (%p141) target = $region20
        $region19: #{tpu_custom_call.1} parent=15 // pred_region
          %s144 = sand.u32 %s48, 1
          %s145 = scalar_lea.sflag [#allocation3], %s144
          %s146 = sand.u32 %s48, 1
          %s147 = smul.addr %s146, 8
          %s148 = scalar_lea.vmem [#allocation2], %s147
          %s150 = ssub.s32 128, 128
          %151 = vsyncadd %s145, %s150
          %s152 = sadd.s32 %s25, %s24
          %s153 = smul.addr %s152, 128
          %s154 = scalar_lea.hbm %s0, %s153
          %s156 = sshll.u32 %s148, 4
          %s157 = int_to_ptr.vmem [resolvable:$true] %s156
          %159 = dma.hbm_to_vmem [thread:$0]  %s154, 128, %s157, %s145
        $region20: #{tpu_custom_call.1} parent=15 // pred_fallthru
          _
        // Predicated region
        $region21: #{tpu_custom_call.1} parent=15 // pred_check
          %p160 = pneg %p86
        $region22: #{tpu_custom_call.1} parent=15 // pred_check_branch
          %162 = sbr.rel (%p160) target = $region24
        $region23: #{tpu_custom_call.1} parent=15 // pred_region
          %s163 = sand.u32 %s76, 1
          %s164 = scalar_lea.sflag [#allocation6], %s163
          %s165 = sand.u32 %s76, 1
          %s166 = smul.addr %s165, 8
          %s167 = scalar_lea.vmem [#allocation5], %s166
          %s169 = ssub.s32 128, 128
          %170 = vsyncadd %s164, %s169
          %s171 = sadd.s32 %s26, %s24
          %s172 = smul.addr %s171, 128
          %s173 = scalar_lea.hbm %s1, %s172
          %s175 = sshll.u32 %s167, 4
          %s176 = int_to_ptr.vmem [resolvable:$true] %s175
          %178 = dma.hbm_to_vmem [thread:$0]  %s173, 128, %s176, %s164
        $region24: #{tpu_custom_call.1} parent=15 // pred_fallthru
          _
      $region16: #{tpu_custom_call.1} parent=5 // pred_fallthru
        _
      %p179 = scmp.le.s32.totalorder 1, %s17
      %p180 = scmp.lt.s32.totalorder %s17, 3
      %p181 = pnand %p179, %p180
      %p182 = pneg %p181
      // Predicated region
      $region25: #{tpu_custom_call.1} parent=5 // pred_check
        _
      $region26: #{tpu_custom_call.1} parent=5 // pred_check_branch
        %184 = sbr.rel (%p181) target = $region28
      $region27: #{tpu_custom_call.1} parent=5 // pred_region
        %s185 = ssub.s32 %s17, 1
        %s186 = sand.u32 %s51, 1
        %s187 = scalar_lea.sflag [#allocation3], %s186
        %s188 = sand.u32 %s51, 1
        %s189 = smul.addr %s188, 8
        %s190 = scalar_lea.vmem [#allocation2], %s189
        // Predicated region
        $region29: #{tpu_custom_call.1} parent=27 // pred_check
          %p191 = pneg %p64
        $region30: #{tpu_custom_call.1} parent=27 // pred_check_branch
          %193 = sbr.rel (%p191) target = $region32
        $region31: #{tpu_custom_call.1} parent=27 // pred_region
          %194 = dma.done %s187, 128
        $region32: #{tpu_custom_call.1} parent=27 // pred_fallthru
          _
        %s195 = sand.u32 %s79, 1
        %s196 = scalar_lea.sflag [#allocation6], %s195
        %s197 = sand.u32 %s79, 1
        %s198 = smul.addr %s197, 8
        %s199 = scalar_lea.vmem [#allocation5], %s198
        // Predicated region
        $region33: #{tpu_custom_call.1} parent=27 // pred_check
          %p200 = pneg %p92
        $region34: #{tpu_custom_call.1} parent=27 // pred_check_branch
          %202 = sbr.rel (%p200) target = $region36
        $region35: #{tpu_custom_call.1} parent=27 // pred_region
          %203 = dma.done %s196, 128
        $region36: #{tpu_custom_call.1} parent=27 // pred_fallthru
          _
        %s204 = sand.u32 %s51, 1
        %s205 = scalar_lea.sflag [#allocation3], %s204
        %s206 = sand.u32 %s51, 1
        %s207 = smul.addr %s206, 8
        %s208 = scalar_lea.vmem [#allocation2], %s207
        %p209 = pneg %p64
        %p210 = pneg %p61
        %s211 = sand.u32 %s79, 1
        %s212 = scalar_lea.sflag [#allocation6], %s211
        %s213 = sand.u32 %s79, 1
        %s214 = smul.addr %s213, 8
        %s215 = scalar_lea.vmem [#allocation5], %s214
        %p216 = pneg %p92
        %p217 = pneg %p89
        %p218 = pneg %p122
        %p219 = pneg %p119
        %s220 = sand.u32 %s109, 1
        %s221 = scalar_lea.sflag [#allocation4], %s220
        %s222 = sand.u32 %s109, 1
        %s223 = smul.addr %s222, 64
        %s224 = scalar_lea.vmem [#allocation7], %s223
        %s225 = smul.u32 8, %s28
        %v226 = vld [vmem:[%s190] sm:$0xff]
        %v227 = vld [vmem:[%s199] sm:$0xff]
        %v229 = vcombine.high %v226, %v226
        %v231 = vunpack.c.l.s4 1966171168
        %v232 = vunpack.c.0.s8 %v231
        %v233 = vlaneseq
        %v234 = vshrl.u32 %v233, 7
        %v235 = vsub.s32 %v232, %v234
        %v236 = vrot.slane %v226, %v235
        %v238 = vunpack.c.l.s4 1966171168
        %v239 = vunpack.c.0.s8 %v238
        %v240 = vlaneseq
        %v241 = vshrl.u32 %v240, 7
        %v242 = vsub.s32 %v239, %v241
        %v243 = vrot.slane %v229, %v242
        %v244 = vcombine.high %v236, %v236
        %v245 = vcombine.high %v243, %v243
        %v247 = vunpack.c.l.s4 1966171168
        %v248 = vunpack.c.0.s8 %v247
        %v249 = vlaneseq
        %v250 = vshrl.u32 %v249, 7
        %v251 = vsub.s32 %v248, %v250
        %v252 = vrot.slane %v236, %v251
        %v254 = vunpack.c.l.s4 1966171168
        %v255 = vunpack.c.0.s8 %v254
        %v256 = vlaneseq
        %v257 = vshrl.u32 %v256, 7
        %v258 = vsub.s32 %v255, %v257
        %v259 = vrot.slane %v243, %v258
        %v261 = vunpack.c.l.s4 1966171168
        %v262 = vunpack.c.0.s8 %v261
        %v263 = vlaneseq
        %v264 = vshrl.u32 %v263, 7
        %v265 = vsub.s32 %v262, %v264
        %v266 = vrot.slane %v244, %v265
        %v268 = vunpack.c.l.s4 1966171168
        %v269 = vunpack.c.0.s8 %v268
        %v270 = vlaneseq
        %v271 = vshrl.u32 %v270, 7
        %v272 = vsub.s32 %v269, %v271
        %v273 = vrot.slane %v245, %v272
        %v274 = vcombine.high %v252, %v252
        %v275 = vcombine.high %v259, %v259
        %v276 = vcombine.high %v266, %v266
        %v277 = vcombine.high %v273, %v273
        %v278 = vlaneseq
        %v279 = vshrl.u32 %v278, 7
        %v280 = vsub.s32 0, %v279
        %v281 = vrot.slane %v252, %v280
        %v282 = vlaneseq
        %v283 = vshrl.u32 %v282, 7
        %v284 = vsub.s32 0, %v283
        %v285 = vrot.slane %v266, %v284
        %v286 = vlaneseq
        %v287 = vshrl.u32 %v286, 7
        %v288 = vsub.s32 0, %v287
        %v289 = vrot.slane %v274, %v288
        %v290 = vlaneseq
        %v291 = vshrl.u32 %v290, 7
        %v292 = vsub.s32 0, %v291
        %v293 = vrot.slane %v276, %v292
        %v294 = vlaneseq
        %v295 = vshrl.u32 %v294, 7
        %v296 = vsub.s32 0, %v295
        %v297 = vrot.slane %v259, %v296
        %v298 = vlaneseq
        %v299 = vshrl.u32 %v298, 7
        %v300 = vsub.s32 0, %v299
        %v301 = vrot.slane %v273, %v300
        %v302 = vlaneseq
        %v303 = vshrl.u32 %v302, 7
        %v304 = vsub.s32 0, %v303
        %v305 = vrot.slane %v275, %v304
        %v306 = vlaneseq
        %v307 = vshrl.u32 %v306, 7
        %v308 = vsub.s32 0, %v307
        %v309 = vrot.slane %v277, %v308
        %v318 = vadd.f32 %v281, %v227
        %v319 = vadd.f32 %v285, %v227
        %v320 = vadd.f32 %v289, %v227
        %v321 = vadd.f32 %v293, %v227
        %v322 = vadd.f32 %v297, %v227
        %v323 = vadd.f32 %v301, %v227
        %v324 = vadd.f32 %v305, %v227
        %v325 = vadd.f32 %v309, %v227
        %326 = vmax.xlane.f32.xlu0 %v318
        %v327 = vpop.xlane.xlu0 %326
        %328 = vmax.xlane.f32.xlu0 %v319
        %v329 = vpop.xlane.xlu0 %328
        %330 = vmax.xlane.f32.xlu0 %v320
        %v331 = vpop.xlane.xlu0 %330
        %332 = vmax.xlane.f32.xlu0 %v321
        %v333 = vpop.xlane.xlu0 %332
        %334 = vmax.xlane.f32.xlu0 %v322
        %v335 = vpop.xlane.xlu0 %334
        %336 = vmax.xlane.f32.xlu0 %v323
        %v337 = vpop.xlane.xlu0 %336
        %338 = vmax.xlane.f32.xlu0 %v324
        %v339 = vpop.xlane.xlu0 %338
        %340 = vmax.xlane.f32.xlu0 %v325
        %v341 = vpop.xlane.xlu0 %340
        %v342 = vsub.f32 %v318, %v327
        %v343 = vsub.f32 %v319, %v329
        %v344 = vsub.f32 %v320, %v331
        %v345 = vsub.f32 %v321, %v333
        %v346 = vsub.f32 %v322, %v335
        %v347 = vsub.f32 %v323, %v337
        %v348 = vsub.f32 %v324, %v339
        %v349 = vsub.f32 %v325, %v341
        %v350 = vmul.f32 %v342, 1.442695
        %v351 = vpow.pop %v350
        %v352 = vmul.f32 %v343, 1.442695
        %v353 = vpow.pop %v352
        %v354 = vmul.f32 %v344, 1.442695
        %v355 = vpow.pop %v354
        %v356 = vmul.f32 %v345, 1.442695
        %v357 = vpow.pop %v356
        %v358 = vmul.f32 %v346, 1.442695
        %v359 = vpow.pop %v358
        %v360 = vmul.f32 %v347, 1.442695
        %v361 = vpow.pop %v360
        %v362 = vmul.f32 %v348, 1.442695
        %v363 = vpow.pop %v362
        %v364 = vmul.f32 %v349, 1.442695
        %v365 = vpow.pop %v364
        %366 = vadd.xlane.f32.xlu0 %v351
        %v367 = vpop.xlane.xlu0 %366
        %368 = vadd.xlane.f32.xlu0 %v353
        %v369 = vpop.xlane.xlu0 %368
        %370 = vadd.xlane.f32.xlu0 %v355
        %v371 = vpop.xlane.xlu0 %370
        %372 = vadd.xlane.f32.xlu0 %v357
        %v373 = vpop.xlane.xlu0 %372
        %374 = vadd.xlane.f32.xlu0 %v359
        %v375 = vpop.xlane.xlu0 %374
        %376 = vadd.xlane.f32.xlu0 %v361
        %v377 = vpop.xlane.xlu0 %376
        %378 = vadd.xlane.f32.xlu0 %v363
        %v379 = vpop.xlane.xlu0 %378
        %380 = vadd.xlane.f32.xlu0 %v365
        %v381 = vpop.xlane.xlu0 %380
        %v382 = vlog2.pop %v367
        %v383 = vmul.f32 %v382, 0.6931472
        %v384 = vlog2.pop %v369
        %v385 = vmul.f32 %v384, 0.6931472
        %v386 = vlog2.pop %v371
        %v387 = vmul.f32 %v386, 0.6931472
        %v388 = vlog2.pop %v373
        %v389 = vmul.f32 %v388, 0.6931472
        %v390 = vlog2.pop %v375
        %v391 = vmul.f32 %v390, 0.6931472
        %v392 = vlog2.pop %v377
        %v393 = vmul.f32 %v392, 0.6931472
        %v394 = vlog2.pop %v379
        %v395 = vmul.f32 %v394, 0.6931472
        %v396 = vlog2.pop %v381
        %v397 = vmul.f32 %v396, 0.6931472
        %v398 = vsub.f32 %v342, %v383
        %v399 = vsub.f32 %v343, %v385
        %v400 = vsub.f32 %v344, %v387
        %v401 = vsub.f32 %v345, %v389
        %v402 = vsub.f32 %v346, %v391
        %v403 = vsub.f32 %v347, %v393
        %v404 = vsub.f32 %v348, %v395
        %v405 = vsub.f32 %v349, %v397
        %406 = vst [vmem:[%s224] sm:$0xff] %v398
        %407 = vst [vmem:[%s224 + $0x8] sm:$0xff] %v399
        %408 = vst [vmem:[%s224 + $0x10] sm:$0xff] %v400
        %409 = vst [vmem:[%s224 + $0x18] sm:$0xff] %v401
        %410 = vst [vmem:[%s224 + $0x20] sm:$0xff] %v402
        %411 = vst [vmem:[%s224 + $0x28] sm:$0xff] %v403
        %412 = vst [vmem:[%s224 + $0x30] sm:$0xff] %v404
        %413 = vst [vmem:[%s224 + $0x38] sm:$0xff] %v405
        %s414 = sand.u32 %s109, 1
        %s415 = scalar_lea.sflag [#allocation4], %s414
        %s416 = sand.u32 %s109, 1
        %s417 = smul.addr %s416, 64
        %s418 = scalar_lea.vmem [#allocation7], %s417
        // Predicated region
        $region37: #{tpu_custom_call.1} parent=27 // pred_check
          %p419 = pneg %p119
        $region38: #{tpu_custom_call.1} parent=27 // pred_check_branch
          %421 = sbr.rel (%p419) target = $region40
        $region39: #{tpu_custom_call.1} parent=27 // pred_region
          %s422 = smul.u32 8, %s28
          %s424 = ssub.s32 1024, 1024
          %425 = vsyncadd %s415, %s424
          %s426 = sadd.s32 %s29, %s422
          %s427 = smul.addr %s27, 8
          %s428 = sadd.s32 %s426, %s427
          %s429 = smul.addr %s428, 128
          %s430 = scalar_lea.hbm %s2, %s429
          %s431 = sshll.u32 %s418, 4
          %s432 = int_to_ptr.vmem [resolvable:$true] %s431
          %437 = dma.vmem_to_hbm [thread:$0]  %s432, 1024, %s430, %s415, 128, 128, 8
        $region40: #{tpu_custom_call.1} parent=27 // pred_fallthru
          _
      $region28: #{tpu_custom_call.1} parent=5 // pred_fallthru
        _
      %p438 = scmp.le.s32.totalorder 2, %s17
      // Predicated region
      $region41: #{tpu_custom_call.1} parent=5 // pred_check
        %p439 = pneg %p438
      $region42: #{tpu_custom_call.1} parent=5 // pred_check_branch
        %441 = sbr.rel (%p439) target = $region44
      $region43: #{tpu_custom_call.1} parent=5 // pred_region
        %s442 = ssub.s32 %s17, 2
        // Predicated region
        $region45: #{tpu_custom_call.1} parent=43 // pred_check
          %p443 = pneg %p125
        $region46: #{tpu_custom_call.1} parent=43 // pred_check_branch
          %445 = sbr.rel (%p443) target = $region48
        $region47: #{tpu_custom_call.1} parent=43 // pred_region
          %s446 = sand.u32 %s110, 1
          %s447 = scalar_lea.sflag [#allocation4], %s446
          %s448 = sand.u32 %s110, 1
          %s449 = smul.addr %s448, 64
          %s450 = scalar_lea.vmem [#allocation7], %s449
          %451 = dma.done %s447, 1024
        $region48: #{tpu_custom_call.1} parent=43 // pred_fallthru
          _
      $region44: #{tpu_custom_call.1} parent=5 // pred_fallthru
        _
    $region6: #{tpu_custom_call.1} parent=1 // loop_footer
      %s21 = sadd.s32 1, %s17
    $region7: #{tpu_custom_call.1} parent=1 // loop_footer_branch
      %16 = sbr.rel target = $region3
    $region8: #{tpu_custom_call.1} parent=1 // loop_exit
      _
    %452 = vsyncpa [#allocation3], 1
    %s453 = scalar_lea.sflag [#allocation3], 1
    %454 = vsyncpa %s453, 1
    %455 = vsyncpa [#allocation6], 1
    %s456 = scalar_lea.sflag [#allocation6], 1
    %457 = vsyncpa %s456, 1
    %458 = vsyncpa [#allocation4], 1
    %s459 = scalar_lea.sflag [#allocation4], 1
    %460 = vsyncpa %s459, 1

</llo_original>
